<compile_context>
chip_gen: v7x
topology: tpu7x:2x2x1
jax: 0.10.0
libtpu: 0.0.40
codegen_flags: <defaults>
</compile_context>

<pallas_src>
import jax
import jax.numpy as jnp
from jax.experimental import pallas as pl
from jax.experimental.pallas import tpu as pltpu

HIDDEN = 128


def _discriminator_kernel(x_ref, w1_ref, b1_ref, w2_ref, b2_ref, o_ref):
    # x_ref:  (TB, D)     f32 or bf16  batch tile of flattened images
    # w1_ref: (D, 128)    bf16  VMEM-resident across the grid
    # b1_ref: (1, 128)    f32   VMEM-resident
    # w2_ref: (1, 128)    f32   VMEM-resident (second-layer weight as a row)
    # b2_ref: (1, 1)      f32   SMEM scalar
    # o_ref:  (TB, 1)     f32
    x = x_ref[...].astype(jnp.bfloat16)          # no-op if x is already bf16
    h = jnp.dot(x, w1_ref[...], preferred_element_type=jnp.float32) + b1_ref[...]
    h = jnp.where(h > 0, h, 0.2 * h)             # LeakyReLU(0.2) on the VPU

    # Layer 2 (N=1): VPU multiply + XLU lane reduction -- keeps the MXU free.
    z = jnp.sum(h * w2_ref[...], axis=-1, keepdims=True) + b2_ref[0, 0]

    # Exact, numerically stable sigmoid (DMA-bound kernel -> exact path is free):
    #   z >= 0: 1 / (1 + exp(-z));   z < 0: exp(z) / (1 + exp(z))
    ez = jnp.exp(-jnp.abs(z))
    o_ref[...] = jnp.where(z >= 0, 1.0 / (1.0 + ez), ez / (1.0 + ez))


def prepare_params(w1, b1, w2, b2):
    """One-time parameter prep (outside the per-call path).

    w1: (128, D) PyTorch layout -> (D, 128) bf16 (MXU-native, no per-call transpose)
    b1: (128,)   -> (1, 128) f32
    w2: (1, 128) -> (1, 128) f32 (row for the VPU mul+reduce)
    b2: (1,)     -> (1, 1)   f32 (SMEM scalar)
    """
    w1_t = jnp.asarray(w1).T.astype(jnp.bfloat16)
    b1_2d = jnp.asarray(b1).reshape(1, HIDDEN).astype(jnp.float32)
    w2_row = jnp.asarray(w2).reshape(1, HIDDEN).astype(jnp.float32)
    b2_2d = jnp.asarray(b2).reshape(1, 1).astype(jnp.float32)
    return w1_t, b1_2d, w2_row, b2_2d


def _round_up(x, m):
    return ((x + m - 1) // m) * m


def _pick_batch_tile(B):
    """Batch-tile size.

    - Always aim for >= 2 grid steps when B >= 16 so the 'parallel' axis can
      shard across both v7x TensorCores (and still >= 2 steps to pipeline).
    - Cap at 4096 rows: double-buffered f32 x is ~25.7 MiB -> fine for v7x's
      64 MiB per-TC VMEM and (with explicit vmem_limit_bytes) v5e/v6e.
    """
    if B < 16:
        return B                      # block == full dim is always legal
    tb = _round_up(pl.cdiv(B, 2), 8)  # >= 2 grid steps, sublane-aligned
    return min(tb, 4096)


def discriminator_forward(img, params):
    """img: (B, C, H, W) float32 or bfloat16 -> validity: (B, 1) float32.

    bf16 images are DMA'd as bf16 (halves HBM traffic on this memory-bound
    kernel); f32 images are cast to bf16 in-register inside the kernel.
    """
    w1_t, b1_2d, w2_row, b2_2d = params
    B = img.shape[0]
    D = w1_t.shape[0]
    in_dtype = img.dtype if img.dtype in (jnp.bfloat16, jnp.float32) else jnp.float32
    x = img.reshape(B, D).astype(in_dtype)        # nn.Flatten (reshape is free)

    tb = _pick_batch_tile(B)
    grid = (pl.cdiv(B, tb),)

    # Double-buffered x tile is the dominant VMEM user; leave headroom for the
    # resident weights, output double-buffer and compiler scratch.
    x_tile_bytes = tb * D * jnp.dtype(in_dtype).itemsize
    vmem_limit = int(min(max(2 * x_tile_bytes + (8 << 20), 16 << 20), 48 << 20))

    out = pl.pallas_call(
        _discriminator_kernel,
        out_shape=jax.ShapeDtypeStruct((B, 1), jnp.float32),
        grid_spec=pltpu.PrefetchScalarGridSpec(
            num_scalar_prefetch=0,
            grid=grid,
            in_specs=[
                pl.BlockSpec((tb, D), lambda i: (i, 0)),        # x: batch-tiled, pipelined
                pl.BlockSpec((D, HIDDEN), lambda i: (0, 0)),    # w1: VMEM-resident
                pl.BlockSpec((1, HIDDEN), lambda i: (0, 0)),    # b1: VMEM-resident
                pl.BlockSpec((1, HIDDEN), lambda i: (0, 0)),    # w2: VMEM-resident
                pl.BlockSpec(memory_space=pltpu.MemorySpace.SMEM),  # b2: SMEM scalar
            ],
            out_specs=pl.BlockSpec((tb, 1), lambda i: (i, 0)),
        ),
        compiler_params=pltpu.CompilerParams(
            dimension_semantics=("parallel",),   # megacore sharding of the batch axis
            vmem_limit_bytes=vmem_limit,
        ),
    )(x, w1_t, b1_2d, w2_row, b2_2d)
    return out


def init_params(key, img_shape=(1, 28, 28)):
    """Deterministic synthetic parameters matching the PyTorch module's shapes."""
    D = int(img_shape[0] * img_shape[1] * img_shape[2])
    k1, k2, k3, k4 = jax.random.split(key, 4)
    # PyTorch nn.Linear default: U(-1/sqrt(fan_in), 1/sqrt(fan_in))
    lim1 = 1.0 / (D ** 0.5)
    lim2 = 1.0 / (HIDDEN ** 0.5)
    w1 = jax.random.uniform(k1, (HIDDEN, D), jnp.float32, -lim1, lim1)  # (out, in)
    b1 = jax.random.uniform(k2, (HIDDEN,), jnp.float32, -lim1, lim1)
    w2 = jax.random.uniform(k3, (1, HIDDEN), jnp.float32, -lim2, lim2)
    b2 = jax.random.uniform(k4, (1,), jnp.float32, -lim2, lim2)
    return w1, b1, w2, b2


if __name__ == "__main__":
    img_shape = (1, 28, 28)
    B = 2

    key = jax.random.PRNGKey(0)
    k_img, k_params = jax.random.split(key)
    img = jax.random.normal(k_img, (B,) + img_shape, dtype=jnp.float32)
    w1, b1, w2, b2 = init_params(k_params, img_shape)

    params = prepare_params(w1, b1, w2, b2)        # once, outside the per-call path
    validity = discriminator_forward(img, params)
    jax.block_until_ready(validity)

    # Reference (pure JAX), same math as the PyTorch module and the same
    # bf16-inputs / f32-accumulation precision choice for layer 1.
    x = img.reshape(B, -1)
    h = jnp.dot(x.astype(jnp.bfloat16), w1.T.astype(jnp.bfloat16),
                preferred_element_type=jnp.float32) + b1
    h = jnp.where(h > 0, h, 0.2 * h)
    ref = jax.nn.sigmoid(h @ w2.T + b2)

    assert validity.shape == (B, 1)
    assert jnp.allclose(validity, ref, atol=2e-3, rtol=0.0)

    # Exercise the multi-tile / megacore path (grid >= 2) and the bf16-input path.
    B2 = 300
    img2 = jax.random.normal(jax.random.PRNGKey(1), (B2,) + img_shape,
                             dtype=jnp.float32).astype(jnp.bfloat16)
    validity2 = discriminator_forward(img2, params)
    jax.block_until_ready(validity2)
    x2 = img2.reshape(B2, -1)
    h2 = jnp.dot(x2, w1.T.astype(jnp.bfloat16),
                 preferred_element_type=jnp.float32) + b1
    h2 = jnp.where(h2 > 0, h2, 0.2 * h2)
    ref2 = jax.nn.sigmoid(h2 @ w2.T + b2)
    assert validity2.shape == (B2, 1)
    assert jnp.allclose(validity2, ref2, atol=2e-3, rtol=0.0)

    print("KERNEL_OK")
</pallas_src>

<mosaic_0001>
module attributes {stable_mosaic.version = 11 : i64} {
  func.func @_discriminator_kernel(%arg0: i32, %arg1: memref<2x784xf32, #tpu.memory_space<vmem>>, %arg2: memref<784x128xbf16, #tpu.memory_space<vmem>>, %arg3: memref<1x128xf32, #tpu.memory_space<vmem>>, %arg4: memref<1x128xf32, #tpu.memory_space<vmem>>, %arg5: memref<1x1xf32, #tpu.memory_space<smem>>, %arg6: memref<2x1xf32, #tpu.memory_space<vmem>>) attributes {dimension_semantics = [#tpu.dimension_semantics<parallel>], iteration_bounds = array<i64: 1>, scalar_prefetch = 0 : i64, scratch_operands = 0 : i64, tpu.core_type = #tpu.core_type<tc>, window_params = [{transform_indices = @transform_0, window_bounds = array<i64: 2, 784>}, {pipeline_mode = #tpu.pipeline_mode<synchronous>, transform_indices = @transform_1, window_bounds = array<i64: 784, 128>}, {pipeline_mode = #tpu.pipeline_mode<synchronous>, transform_indices = @transform_2, window_bounds = array<i64: 1, 128>}, {pipeline_mode = #tpu.pipeline_mode<synchronous>, transform_indices = @transform_3, window_bounds = array<i64: 1, 128>}, {transform_indices = @transform_4, window_bounds = array<i64: 1, 1>}, {transform_indices = @transform_5, window_bounds = array<i64: 2, 1>}]} {
    %c0 = arith.constant 0 : index
    %c0_0 = arith.constant 0 : index
    %0 = vector.load %arg1[%c0, %c0_0] : memref<2x784xf32, #tpu.memory_space<vmem>>, vector<2x784xf32>
    %1 = arith.truncf %0 : vector<2x784xf32> to vector<2x784xbf16>
    %c0_1 = arith.constant 0 : index
    %c0_2 = arith.constant 0 : index
    %2 = vector.load %arg2[%c0_1, %c0_2] : memref<784x128xbf16, #tpu.memory_space<vmem>>, vector<784x128xbf16>
    %cst = arith.constant dense<0.000000e+00> : vector<2x128xf32>
    %3 = tpu.matmul %1, %2, %cst {dimension_numbers = #tpu.dot_dimension_numbers<[1], [0], [0], [1], [0, 0, 1, 1], [], []>} : vector<2x784xbf16>, vector<784x128xbf16>, vector<2x128xf32> -> vector<2x128xf32>
    %c0_3 = arith.constant 0 : index
    %c0_4 = arith.constant 0 : index
    %4 = vector.load %arg3[%c0_3, %c0_4] : memref<1x128xf32, #tpu.memory_space<vmem>>, vector<1x128xf32>
    %5 = vector.broadcast %4 : vector<1x128xf32> to vector<2x128xf32>
    %6 = arith.addf %3, %5 : vector<2x128xf32>
    %cst_5 = arith.constant 0.000000e+00 : f32
    %7 = vector.broadcast %cst_5 : f32 to vector<2x128xf32>
    %8 = arith.cmpf ogt, %6, %7 : vector<2x128xf32>
    %cst_6 = arith.constant 2.000000e-01 : f32
    %9 = vector.broadcast %cst_6 : f32 to vector<2x128xf32>
    %10 = arith.mulf %9, %6 : vector<2x128xf32>
    %11 = arith.select %8, %6, %10 : vector<2x128xi1>, vector<2x128xf32>
    %c0_7 = arith.constant 0 : index
    %c0_8 = arith.constant 0 : index
    %12 = vector.load %arg4[%c0_7, %c0_8] : memref<1x128xf32, #tpu.memory_space<vmem>>, vector<1x128xf32>
    %13 = vector.broadcast %12 : vector<1x128xf32> to vector<2x128xf32>
    %14 = arith.mulf %11, %13 : vector<2x128xf32>
    %cst_9 = arith.constant dense<0.000000e+00> : vector<2xf32>
    %15 = vector.multi_reduction <add>, %14, %cst_9 [1] : vector<2x128xf32> to vector<2xf32>
    %16 = vector.shape_cast %15 : vector<2xf32> to vector<2x1xf32>
    %c0_10 = arith.constant 0 : index
    %c0_11 = arith.constant 0 : index
    %17 = memref.load %arg5[%c0_10, %c0_11] : memref<1x1xf32, #tpu.memory_space<smem>>
    %18 = vector.broadcast %17 : f32 to vector<2x1xf32>
    %19 = arith.addf %16, %18 : vector<2x1xf32>
    %20 = math.absf %19 : vector<2x1xf32>
    %cst_12 = arith.constant 0.000000e+00 : f32
    %21 = vector.broadcast %cst_12 : f32 to vector<2x1xf32>
    %22 = arith.subf %21, %20 : vector<2x1xf32>
    %23 = math.exp %22 : vector<2x1xf32>
    %cst_13 = arith.constant 0.000000e+00 : f32
    %24 = vector.broadcast %cst_13 : f32 to vector<2x1xf32>
    %25 = arith.cmpf oge, %19, %24 : vector<2x1xf32>
    %cst_14 = arith.constant 1.000000e+00 : f32
    %26 = vector.broadcast %cst_14 : f32 to vector<2x1xf32>
    %27 = arith.addf %26, %23 : vector<2x1xf32>
    %cst_15 = arith.constant 1.000000e+00 : f32
    %28 = vector.broadcast %cst_15 : f32 to vector<2x1xf32>
    %29 = arith.divf %28, %27 : vector<2x1xf32>
    %cst_16 = arith.constant 1.000000e+00 : f32
    %30 = vector.broadcast %cst_16 : f32 to vector<2x1xf32>
    %31 = arith.addf %30, %23 : vector<2x1xf32>
    %32 = arith.divf %23, %31 : vector<2x1xf32>
    %33 = arith.select %25, %29, %32 : vector<2x1xi1>, vector<2x1xf32>
    %c0_17 = arith.constant 0 : index
    %c0_18 = arith.constant 0 : index
    %34 = vector.load %arg6[%c0_17, %c0_18] : memref<2x1xf32, #tpu.memory_space<vmem>>, vector<2x1xf32>
    tpu.vector_store %arg6[%c0_17, %c0_18], %33 {strides = array<i32>} : memref<2x1xf32, #tpu.memory_space<vmem>>, vector<2x1xf32>,
    return
  }
  func.func @transform_0(%arg0: i32) -> (i32, i32) {
    %c0_i32 = arith.constant 0 : i32
    %c0_i32_0 = arith.constant 0 : i32
    return %arg0, %c0_i32 : i32, i32
  }
  func.func @transform_1(%arg0: i32) -> (i32, i32) {
    %c0_i32 = arith.constant 0 : i32
    %c0_i32_0 = arith.constant 0 : i32
    %c0_i32_1 = arith.constant 0 : i32
    return %c0_i32, %c0_i32_0 : i32, i32
  }
  func.func @transform_2(%arg0: i32) -> (i32, i32) {
    %c0_i32 = arith.constant 0 : i32
    %c0_i32_0 = arith.constant 0 : i32
    %c0_i32_1 = arith.constant 0 : i32
    return %c0_i32, %c0_i32_0 : i32, i32
  }
  func.func @transform_3(%arg0: i32) -> (i32, i32) {
    %c0_i32 = arith.constant 0 : i32
    %c0_i32_0 = arith.constant 0 : i32
    %c0_i32_1 = arith.constant 0 : i32
    return %c0_i32, %c0_i32_0 : i32, i32
  }
  func.func @transform_4(%arg0: i32) -> (i32, i32) {
    %c0_i32 = arith.constant 0 : i32
    %c0_i32_0 = arith.constant 0 : i32
    %c0_i32_1 = arith.constant 0 : i32
    return %c0_i32, %c0_i32_0 : i32, i32
  }
  func.func @transform_5(%arg0: i32) -> (i32, i32) {
    %c0_i32 = arith.constant 0 : i32
    %c0_i32_0 = arith.constant 0 : i32
    return %arg0, %c0_i32 : i32, i32
  }
}

</mosaic_0001>

<llo_original>
// kernel: tpu_custom_call.1
$region0: #{tpu_custom_call.1}
  #allocation0 [shape = 'u32[]', space=smem, size = 0x4, offset = 0x4, fixed_abs, tag = 'smem constant byte address 0x4 - core index']
  #allocation1 [shape = 'u32[144,128]{1,0:T(1,128)}', space=vmem, size = 0x12000, scoped, tag = 'internal scratch']
  #allocation2 [shape = 'f32[1,1]{1,0:T(1,128)S(6)}', space=smem, size = 0x200, scoped, tag = 'scoped memory for tpu_custom_call.1']
  %s0 = inlined_call_operand.hbm [shape: f32[2,784], index: 0, kind: input, shape index: {}]
  %s1 = inlined_call_operand.hbm [shape: bf16[784,128], index: 1, kind: input, shape index: {}]
  %s2 = inlined_call_operand.vmem [shape: f32[1,128], index: 2, kind: input, shape index: {}]
  %s3 = inlined_call_operand.vmem [shape: f32[1,128], index: 3, kind: input, shape index: {}]
  %s4 = inlined_call_operand.<no memory space> [shape: f32[1,1], index: 4, kind: input, shape index: {}]
  %s5 = inlined_call_operand.vmem [shape: f32[2,1], index: 5, kind: output, shape index: {}]
  %s6 = sld [smem:[#allocation0]]
  $region38: #{tpu_custom_call.1} parent=0
    _
  %s8 = ssub.s32 1, %s6
  %s9 = scalar_select 0, %s8, %s6
  %10 = sst [smem:[#allocation2]] %s4
  $region1: #{tpu_custom_call.1} parent=0
    #allocation3 [shape = 'u8[7168]{0}', space=vmem, size = 0x1c00, scoped, tag = 'input window, operand 0, single buffered']
    #allocation4 [shape = 's32[1]{0}', space=sflag, size = 0x4, scoped, tag = 'scoped memory for tpu_custom_call.1']
    #allocation5 [shape = 'u8[200704]{0}', space=vmem, size = 0x31000, scoped, tag = 'input window, operand 1, single buffered']
    #allocation6 [shape = 's32[1]{0}', space=sflag, size = 0x4, scoped, tag = 'scoped memory for tpu_custom_call.1']
    %11 = vsyncpa [#allocation4], 0
    %12 = vsyncpa [#allocation6], 0
    // Predicated region
    $region2: #{tpu_custom_call.1} parent=1 // pred_check
      _
    $region3: #{tpu_custom_call.1} parent=1 // pred_check_branch
      %14 = sbr.rel (0) target = $region5
    $region4: #{tpu_custom_call.1} parent=1 // pred_region
      %s16 = ssub.s32 224, 224
      %17 = vsyncadd [#allocation4], %s16
      %s19 = sshll.u32 [#allocation3], 4
      %s20 = int_to_ptr.vmem [resolvable:$true] %s19
      %22 = dma.hbm_to_vmem [thread:$0]  %s0, 224, %s20, [#allocation4]
    $region5: #{tpu_custom_call.1} parent=1 // pred_fallthru
      _
    // Predicated region
    $region6: #{tpu_custom_call.1} parent=1 // pred_check
      _
    $region7: #{tpu_custom_call.1} parent=1 // pred_check_branch
      %24 = sbr.rel (0) target = $region9
    $region8: #{tpu_custom_call.1} parent=1 // pred_region
      %s26 = ssub.s32 6272, 6272
      %27 = vsyncadd [#allocation6], %s26
      %s28 = sshll.u32 [#allocation5], 4
      %s29 = int_to_ptr.vmem [resolvable:$true] %s28
      %34 = dma.hbm_to_vmem [thread:$0]  %s1, 6272, %s29, [#allocation6], 64, 64, 4
    $region9: #{tpu_custom_call.1} parent=1 // pred_fallthru
      _
    // Predicated region
    $region10: #{tpu_custom_call.1} parent=1 // pred_check
      _
    $region11: #{tpu_custom_call.1} parent=1 // pred_check_branch
      %36 = sbr.rel (0) target = $region13
    $region12: #{tpu_custom_call.1} parent=1 // pred_region
      _
    $region13: #{tpu_custom_call.1} parent=1 // pred_fallthru
      _
    // Predicated region
    $region14: #{tpu_custom_call.1} parent=1 // pred_check
      _
    $region15: #{tpu_custom_call.1} parent=1 // pred_check_branch
      %38 = sbr.rel (0) target = $region17
    $region16: #{tpu_custom_call.1} parent=1 // pred_region
      _
    $region17: #{tpu_custom_call.1} parent=1 // pred_fallthru
      _
    // Predicated region
    $region18: #{tpu_custom_call.1} parent=1 // pred_check
      _
    $region19: #{tpu_custom_call.1} parent=1 // pred_check_branch
      %40 = sbr.rel (0) target = $region21
    $region20: #{tpu_custom_call.1} parent=1 // pred_region
      _
    $region21: #{tpu_custom_call.1} parent=1 // pred_fallthru
      _
    // Predicated region
    $region22: #{tpu_custom_call.1} parent=1 // pred_check
      _
    $region23: #{tpu_custom_call.1} parent=1 // pred_check_branch
      %42 = sbr.rel (0) target = $region25
    $region24: #{tpu_custom_call.1} parent=1 // pred_region
      %43 = dma.done [#allocation4], 224
    $region25: #{tpu_custom_call.1} parent=1 // pred_fallthru
      _
    // Predicated region
    $region26: #{tpu_custom_call.1} parent=1 // pred_check
      _
    $region27: #{tpu_custom_call.1} parent=1 // pred_check_branch
      %45 = sbr.rel (0) target = $region29
    $region28: #{tpu_custom_call.1} parent=1 // pred_region
      %46 = dma.done [#allocation6], 6272
    $region29: #{tpu_custom_call.1} parent=1 // pred_fallthru
      _
    %v48 = vld [vmem:[#allocation3] sm:$0xff]
    %v49 = vld [vmem:[#allocation3 + $0x8] sm:$0x3f]
    %v52 = vcombine.high %v48, %v48
    %v54 = vunpack.c.l.s4 1983009808
    %v55 = vunpack.c.0.s8 %v54
    %v56 = vlaneseq
    %v57 = vshrl.u32 %v56, 7
    %v58 = vsub.s32 %v55, %v57
    %v59 = vrot.slane %v48, %v58
    %v61 = vunpack.c.l.s4 1983009808
    %v62 = vunpack.c.0.s8 %v61
    %v63 = vlaneseq
    %v64 = vshrl.u32 %v63, 7
    %v65 = vsub.s32 %v62, %v64
    %v66 = vrot.slane %v52, %v65
    %v67 = vcombine.high %v59, %v59
    %v68 = vcombine.high %v66, %v66
    %v69 = vcombine.high %v49, %v49
    %v71 = vunpack.c.l.s4 1983009808
    %v72 = vunpack.c.0.s8 %v71
    %v73 = vlaneseq
    %v74 = vshrl.u32 %v73, 7
    %v75 = vsub.s32 %v72, %v74
    %v76 = vrot.slane %v49, %v75
    %v78 = vunpack.c.l.s4 1983009808
    %v79 = vunpack.c.0.s8 %v78
    %v80 = vlaneseq
    %v81 = vshrl.u32 %v80, 7
    %v82 = vsub.s32 %v79, %v81
    %v83 = vrot.slane %v69, %v82
    %v84 = vcombine.high %v76, %v76
    %v92 = vpack.c.bf16 %v59, %v59
    %v93 = vpack.c.bf16 %v67, %v67
    %v94 = vpack.c.bf16 %v66, %v66
    %v95 = vpack.c.bf16 %v68, %v68
    %v96 = vpack.c.bf16 %v76, %v76
    %v97 = vpack.c.bf16 %v84, %v84
    %v98 = vpack.c.bf16 %v83, %v83
    %v99 = vld [vmem:[#allocation5] sm:$0xf]
    %v100 = vld [vmem:[#allocation5 + $0x4] sm:$0xf]
    %v101 = vld [vmem:[#allocation5 + $0x8] sm:$0xf]
    %v102 = vld [vmem:[#allocation5 + $0xc] sm:$0xf]
    %v103 = vld [vmem:[#allocation5 + $0x10] sm:$0xf]
    %v104 = vld [vmem:[#allocation5 + $0x14] sm:$0xf]
    %v105 = vld [vmem:[#allocation5 + $0x18] sm:$0xf]
    %v106 = vld [vmem:[#allocation5 + $0x1c] sm:$0xf]
    %v107 = vld [vmem:[#allocation5 + $0x20] sm:$0xf]
    %v108 = vld [vmem:[#allocation5 + $0x24] sm:$0xf]
    %v109 = vld [vmem:[#allocation5 + $0x28] sm:$0xf]
    %v110 = vld [vmem:[#allocation5 + $0x2c] sm:$0xf]
    %v111 = vld [vmem:[#allocation5 + $0x30] sm:$0xf]
    %v112 = vld [vmem:[#allocation5 + $0x34] sm:$0xf]
    %v113 = vld [vmem:[#allocation5 + $0x38] sm:$0xf]
    %v114 = vld [vmem:[#allocation5 + $0x3c] sm:$0xf]
    %v115 = vld [vmem:[#allocation5 + $0x40] sm:$0xf]
    %v116 = vld [vmem:[#allocation5 + $0x44] sm:$0xf]
    %v117 = vld [vmem:[#allocation5 + $0x48] sm:$0xf]
    %v118 = vld [vmem:[#allocation5 + $0x4c] sm:$0xf]
    %v119 = vld [vmem:[#allocation5 + $0x50] sm:$0xf]
    %v120 = vld [vmem:[#allocation5 + $0x54] sm:$0xf]
    %v121 = vld [vmem:[#allocation5 + $0x58] sm:$0xf]
    %v122 = vld [vmem:[#allocation5 + $0x5c] sm:$0xf]
    %v123 = vld [vmem:[#allocation5 + $0x60] sm:$0xf]
    %v124 = vld [vmem:[#allocation5 + $0x64] sm:$0xf]
    %v125 = vld [vmem:[#allocation5 + $0x68] sm:$0xf]
    %v126 = vld [vmem:[#allocation5 + $0x6c] sm:$0xf]
    %v127 = vld [vmem:[#allocation5 + $0x70] sm:$0xf]
    %v128 = vld [vmem:[#allocation5 + $0x74] sm:$0xf]
    %v129 = vld [vmem:[#allocation5 + $0x78] sm:$0xf]
    %v130 = vld [vmem:[#allocation5 + $0x7c] sm:$0xf]
    %v131 = vld [vmem:[#allocation5 + $0x80] sm:$0xf]
    %v132 = vld [vmem:[#allocation5 + $0x84] sm:$0xf]
    %v133 = vld [vmem:[#allocation5 + $0x88] sm:$0xf]
    %v134 = vld [vmem:[#allocation5 + $0x8c] sm:$0xf]
    %v135 = vld [vmem:[#allocation5 + $0x90] sm:$0xf]
    %v136 = vld [vmem:[#allocation5 + $0x94] sm:$0xf]
    %v137 = vld [vmem:[#allocation5 + $0x98] sm:$0xf]
    %v138 = vld [vmem:[#allocation5 + $0x9c] sm:$0xf]
    %v139 = vld [vmem:[#allocation5 + $0xa0] sm:$0xf]
    %v140 = vld [vmem:[#allocation5 + $0xa4] sm:$0xf]
    %v141 = vld [vmem:[#allocation5 + $0xa8] sm:$0xf]
    %v142 = vld [vmem:[#allocation5 + $0xac] sm:$0xf]
    %v143 = vld [vmem:[#allocation5 + $0xb0] sm:$0xf]
    %v144 = vld [vmem:[#allocation5 + $0xb4] sm:$0xf]
    %v145 = vld [vmem:[#allocation5 + $0xb8] sm:$0xf]
    %v146 = vld [vmem:[#allocation5 + $0xbc] sm:$0xf]
    %v147 = vld [vmem:[#allocation5 + $0xc0] sm:$0xf]
    %v148 = vld [vmem:[#allocation5 + $0xc4] sm:$0xf]
    %v149 = vld [vmem:[#allocation5 + $0xc8] sm:$0xf]
    %v150 = vld [vmem:[#allocation5 + $0xcc] sm:$0xf]
    %v151 = vld [vmem:[#allocation5 + $0xd0] sm:$0xf]
    %v152 = vld [vmem:[#allocation5 + $0xd4] sm:$0xf]
    %v153 = vld [vmem:[#allocation5 + $0xd8] sm:$0xf]
    %v154 = vld [vmem:[#allocation5 + $0xdc] sm:$0xf]
    %v155 = vld [vmem:[#allocation5 + $0xe0] sm:$0xf]
    %v156 = vld [vmem:[#allocation5 + $0xe4] sm:$0xf]
    %v157 = vld [vmem:[#allocation5 + $0xe8] sm:$0xf]
    %v158 = vld [vmem:[#allocation5 + $0xec] sm:$0xf]
    %v159 = vld [vmem:[#allocation5 + $0xf0] sm:$0xf]
    %v160 = vld [vmem:[#allocation5 + $0xf4] sm:$0xf]
    %v161 = vld [vmem:[#allocation5 + $0xf8] sm:$0xf]
    %v162 = vld [vmem:[#allocation5 + $0xfc] sm:$0xf]
    %v163 = vld [vmem:[#allocation5 + $0x100] sm:$0xf]
    %v164 = vld [vmem:[#allocation5 + $0x104] sm:$0xf]
    %v165 = vld [vmem:[#allocation5 + $0x108] sm:$0xf]
    %v166 = vld [vmem:[#allocation5 + $0x10c] sm:$0xf]
    %v167 = vld [vmem:[#allocation5 + $0x110] sm:$0xf]
    %v168 = vld [vmem:[#allocation5 + $0x114] sm:$0xf]
    %v169 = vld [vmem:[#allocation5 + $0x118] sm:$0xf]
    %v170 = vld [vmem:[#allocation5 + $0x11c] sm:$0xf]
    %v171 = vld [vmem:[#allocation5 + $0x120] sm:$0xf]
    %v172 = vld [vmem:[#allocation5 + $0x124] sm:$0xf]
    %v173 = vld [vmem:[#allocation5 + $0x128] sm:$0xf]
    %v174 = vld [vmem:[#allocation5 + $0x12c] sm:$0xf]
    %v175 = vld [vmem:[#allocation5 + $0x130] sm:$0xf]
    %v176 = vld [vmem:[#allocation5 + $0x134] sm:$0xf]
    %v177 = vld [vmem:[#allocation5 + $0x138] sm:$0xf]
    %v178 = vld [vmem:[#allocation5 + $0x13c] sm:$0xf]
    %v179 = vld [vmem:[#allocation5 + $0x140] sm:$0xf]
    %v180 = vld [vmem:[#allocation5 + $0x144] sm:$0xf]
    %v181 = vld [vmem:[#allocation5 + $0x148] sm:$0xf]
    %v182 = vld [vmem:[#allocation5 + $0x14c] sm:$0xf]
    %v183 = vld [vmem:[#allocation5 + $0x150] sm:$0xf]
    %v184 = vld [vmem:[#allocation5 + $0x154] sm:$0xf]
    %v185 = vld [vmem:[#allocation5 + $0x158] sm:$0xf]
    %v186 = vld [vmem:[#allocation5 + $0x15c] sm:$0xf]
    %v187 = vld [vmem:[#allocation5 + $0x160] sm:$0xf]
    %v188 = vld [vmem:[#allocation5 + $0x164] sm:$0xf]
    %v189 = vld [vmem:[#allocation5 + $0x168] sm:$0xf]
    %v190 = vld [vmem:[#allocation5 + $0x16c] sm:$0xf]
    %v191 = vld [vmem:[#allocation5 + $0x170] sm:$0xf]
    %v192 = vld [vmem:[#allocation5 + $0x174] sm:$0xf]
    %v193 = vld [vmem:[#allocation5 + $0x178] sm:$0xf]
    %v194 = vld [vmem:[#allocation5 + $0x17c] sm:$0xf]
    %v195 = vld [vmem:[#allocation5 + $0x180] sm:$0xf]
    %v196 = vld [vmem:[#allocation5 + $0x184] sm:$0xf]
    %v197 = vld [vmem:[%s2] sm:$0x1]
    %v199 = vlaneseq
    %v200 = vshrl.u32 %v199, 7
    %v201 = vsub.s32 0, %v200
    %v202 = vrot.slane %v197, %v201
    %v302 = vunpack.c.l.b16 %v99
    %v303 = vunpack.c.l.b16 %v100
    %v304 = vunpack.c.l.b16 %v101
    %v305 = vunpack.c.l.b16 %v102
    %v306 = vunpack.c.l.b16 %v103
    %v307 = vunpack.c.l.b16 %v104
    %v308 = vunpack.c.l.b16 %v105
    %v309 = vunpack.c.l.b16 %v106
    %v310 = vunpack.c.l.b16 %v107
    %v311 = vunpack.c.l.b16 %v108
    %v312 = vunpack.c.l.b16 %v109
    %v313 = vunpack.c.l.b16 %v110
    %v314 = vunpack.c.l.b16 %v111
    %v315 = vunpack.c.l.b16 %v112
    %v316 = vunpack.c.l.b16 %v113
    %v317 = vunpack.c.l.b16 %v114
    %v318 = vunpack.c.l.b16 %v115
    %v319 = vunpack.c.l.b16 %v116
    %v320 = vunpack.c.l.b16 %v117
    %v321 = vunpack.c.l.b16 %v118
    %v322 = vunpack.c.l.b16 %v119
    %v323 = vunpack.c.l.b16 %v120
    %v324 = vunpack.c.l.b16 %v121
    %v325 = vunpack.c.l.b16 %v122
    %v326 = vunpack.c.l.b16 %v123
    %v327 = vunpack.c.l.b16 %v124
    %v328 = vunpack.c.l.b16 %v125
    %v329 = vunpack.c.l.b16 %v126
    %v330 = vunpack.c.l.b16 %v127
    %v331 = vunpack.c.l.b16 %v128
    %v332 = vunpack.c.l.b16 %v129
    %v333 = vunpack.c.l.b16 %v130
    %v334 = vunpack.c.l.b16 %v131
    %v335 = vunpack.c.l.b16 %v132
    %v336 = vunpack.c.l.b16 %v133
    %v337 = vunpack.c.l.b16 %v134
    %v338 = vunpack.c.l.b16 %v135
    %v339 = vunpack.c.l.b16 %v136
    %v340 = vunpack.c.l.b16 %v137
    %v341 = vunpack.c.l.b16 %v138
    %v342 = vunpack.c.l.b16 %v139
    %v343 = vunpack.c.l.b16 %v140
    %v344 = vunpack.c.l.b16 %v141
    %v345 = vunpack.c.l.b16 %v142
    %v346 = vunpack.c.l.b16 %v143
    %v347 = vunpack.c.l.b16 %v144
    %v348 = vunpack.c.l.b16 %v145
    %v349 = vunpack.c.l.b16 %v146
    %v350 = vunpack.c.l.b16 %v147
    %v351 = vunpack.c.l.b16 %v148
    %v352 = vunpack.c.l.b16 %v149
    %v353 = vunpack.c.l.b16 %v150
    %v354 = vunpack.c.l.b16 %v151
    %v355 = vunpack.c.l.b16 %v152
    %v356 = vunpack.c.l.b16 %v153
    %v357 = vunpack.c.l.b16 %v154
    %v358 = vunpack.c.l.b16 %v155
    %v359 = vunpack.c.l.b16 %v156
    %v360 = vunpack.c.l.b16 %v157
    %v361 = vunpack.c.l.b16 %v158
    %v362 = vunpack.c.l.b16 %v159
    %v363 = vunpack.c.l.b16 %v160
    %v364 = vunpack.c.l.b16 %v161
    %v365 = vunpack.c.l.b16 %v162
    %v366 = vunpack.c.l.b16 %v163
    %v367 = vunpack.c.l.b16 %v164
    %v368 = vunpack.c.l.b16 %v165
    %v369 = vunpack.c.l.b16 %v166
    %v370 = vunpack.c.l.b16 %v167
    %v371 = vunpack.c.l.b16 %v168
    %v372 = vunpack.c.l.b16 %v169
    %v373 = vunpack.c.l.b16 %v170
    %v374 = vunpack.c.l.b16 %v171
    %v375 = vunpack.c.l.b16 %v172
    %v376 = vunpack.c.l.b16 %v173
    %v377 = vunpack.c.l.b16 %v174
    %v378 = vunpack.c.l.b16 %v175
    %v379 = vunpack.c.l.b16 %v176
    %v380 = vunpack.c.l.b16 %v177
    %v381 = vunpack.c.l.b16 %v178
    %v382 = vunpack.c.l.b16 %v179
    %v383 = vunpack.c.l.b16 %v180
    %v384 = vunpack.c.l.b16 %v181
    %v385 = vunpack.c.l.b16 %v182
    %v386 = vunpack.c.l.b16 %v183
    %v387 = vunpack.c.l.b16 %v184
    %v388 = vunpack.c.l.b16 %v185
    %v389 = vunpack.c.l.b16 %v186
    %v390 = vunpack.c.l.b16 %v187
    %v391 = vunpack.c.l.b16 %v188
    %v392 = vunpack.c.l.b16 %v189
    %v393 = vunpack.c.l.b16 %v190
    %v394 = vunpack.c.l.b16 %v191
    %v395 = vunpack.c.l.b16 %v192
    %v396 = vunpack.c.l.b16 %v193
    %v397 = vunpack.c.l.b16 %v194
    %v398 = vunpack.c.l.b16 %v195
    %v399 = vunpack.c.l.b16 %v196
    %v400 = vpack.c.b16 %v303, %v302
    %v401 = vpack.c.b16 %v305, %v304
    %v402 = vpack.c.b16 %v307, %v306
    %v403 = vpack.c.b16 %v309, %v308
    %v404 = vpack.c.b16 %v311, %v310
    %v405 = vpack.c.b16 %v313, %v312
    %v406 = vpack.c.b16 %v315, %v314
    %v407 = vpack.c.b16 %v317, %v316
    %v408 = vpack.c.b16 %v319, %v318
    %v409 = vpack.c.b16 %v321, %v320
    %v410 = vpack.c.b16 %v323, %v322
    %v411 = vpack.c.b16 %v325, %v324
    %v412 = vpack.c.b16 %v327, %v326
    %v413 = vpack.c.b16 %v329, %v328
    %v414 = vpack.c.b16 %v331, %v330
    %v415 = vpack.c.b16 %v333, %v332
    %v416 = vpack.c.b16 %v335, %v334
    %v417 = vpack.c.b16 %v337, %v336
    %v418 = vpack.c.b16 %v339, %v338
    %v419 = vpack.c.b16 %v341, %v340
    %v420 = vpack.c.b16 %v343, %v342
    %v421 = vpack.c.b16 %v345, %v344
    %v422 = vpack.c.b16 %v347, %v346
    %v423 = vpack.c.b16 %v349, %v348
    %v424 = vpack.c.b16 %v351, %v350
    %v425 = vpack.c.b16 %v353, %v352
    %v426 = vpack.c.b16 %v355, %v354
    %v427 = vpack.c.b16 %v357, %v356
    %v428 = vpack.c.b16 %v359, %v358
    %v429 = vpack.c.b16 %v361, %v360
    %v430 = vpack.c.b16 %v363, %v362
    %v431 = vpack.c.b16 %v365, %v364
    %v432 = vpack.c.b16 %v367, %v366
    %v433 = vpack.c.b16 %v369, %v368
    %v434 = vpack.c.b16 %v371, %v370
    %v435 = vpack.c.b16 %v373, %v372
    %v436 = vpack.c.b16 %v375, %v374
    %v437 = vpack.c.b16 %v377, %v376
    %v438 = vpack.c.b16 %v379, %v378
    %v439 = vpack.c.b16 %v381, %v380
    %v440 = vpack.c.b16 %v383, %v382
    %v441 = vpack.c.b16 %v385, %v384
    %v442 = vpack.c.b16 %v387, %v386
    %v443 = vpack.c.b16 %v389, %v388
    %v444 = vpack.c.b16 %v391, %v390
    %v445 = vpack.c.b16 %v393, %v392
    %v446 = vpack.c.b16 %v395, %v394
    %v447 = vpack.c.b16 %v397, %v396
    %v448 = vpack.c.b16 %v399, %v398
    %vm498 = vcmask 130048
    %v500 = vsel %vm498, %v98, 0
    %502 = vmatprep.subr.bf16.mxu0 0
    %503 = vmatpush1.bf16.msra.mxu0 %v400
    %504 = vmatprep.subr.bf16.mxu0 0
    %505 = vmatpush1.bf16.msra.mxu0 %v401
    %506 = vmatprep.subr.bf16.mxu0 0
    %507 = vmatpush1.bf16.msra.mxu0 %v402
    %508 = vmatprep.subr.bf16.mxu0 0
    %509 = vmatpush1.bf16.msra.mxu0 %v403
    %510 = vmatprep.subr.bf16.mxu0 0
    %511 = vmatpush1.bf16.msra.mxu0 %v404
    %512 = vmatprep.subr.bf16.mxu0 0
    %513 = vmatpush1.bf16.msra.mxu0 %v405
    %514 = vmatprep.subr.bf16.mxu0 0
    %515 = vmatpush1.bf16.msra.mxu0 %v406
    %516 = vmatprep.subr.bf16.mxu0 0
    %517 = vmatpush1.bf16.msra.mxu0 %v407
    %518 = vmatprep.subr.bf16.mxu0 0
    %519 = vmatpush1.bf16.msra.mxu0 %v408
    %520 = vmatprep.subr.bf16.mxu0 0
    %521 = vmatpush1.bf16.msra.mxu0 %v409
    %522 = vmatprep.subr.bf16.mxu0 0
    %523 = vmatpush1.bf16.msra.mxu0 %v410
    %524 = vmatprep.subr.bf16.mxu0 0
    %525 = vmatpush1.bf16.msra.mxu0 %v411
    %526 = vmatprep.subr.bf16.mxu0 0
    %527 = vmatpush1.bf16.msra.mxu0 %v412
    %528 = vmatprep.subr.bf16.mxu0 0
    %529 = vmatpush1.bf16.msra.mxu0 %v413
    %530 = vmatprep.subr.bf16.mxu0 0
    %531 = vmatpush1.bf16.msra.mxu0 %v414
    %532 = vmatprep.subr.bf16.mxu0 0
    %533 = vmatpush1.bf16.msra.mxu0 %v415
    %534 = vmatprep.mubr.bf16.mxu0 %v93
    %535 = vmatmul.mubr.bf16.gmra.mrb[0].mxu0 %v92
    %v536 = vpop.f32.mrb[0].mxu0
    %v537 = vadd.f32 %v202, %v536
    %v538 = vpop.f32.mrb[0].mxu0
    %v539 = vpop.f32.mrb[0].mxu0
    %v540 = vpop.f32.mrb[0].mxu0
    %541 = vdwg.mxu0
    %542 = vmatprep.subr.bf16.mxu0 0
    %543 = vmatpush1.bf16.msra.mxu0 %v416
    %544 = vmatprep.subr.bf16.mxu0 0
    %545 = vmatpush1.bf16.msra.mxu0 %v417
    %546 = vmatprep.subr.bf16.mxu0 0
    %547 = vmatpush1.bf16.msra.mxu0 %v418
    %548 = vmatprep.subr.bf16.mxu0 0
    %549 = vmatpush1.bf16.msra.mxu0 %v419
    %550 = vmatprep.subr.bf16.mxu0 0
    %551 = vmatpush1.bf16.msra.mxu0 %v420
    %552 = vmatprep.subr.bf16.mxu0 0
    %553 = vmatpush1.bf16.msra.mxu0 %v421
    %554 = vmatprep.subr.bf16.mxu0 0
    %555 = vmatpush1.bf16.msra.mxu0 %v422
    %556 = vmatprep.subr.bf16.mxu0 0
    %557 = vmatpush1.bf16.msra.mxu0 %v423
    %558 = vmatprep.subr.bf16.mxu0 0
    %559 = vmatpush1.bf16.msra.mxu0 %v424
    %560 = vmatprep.subr.bf16.mxu0 0
    %561 = vmatpush1.bf16.msra.mxu0 %v425
    %562 = vmatprep.subr.bf16.mxu0 0
    %563 = vmatpush1.bf16.msra.mxu0 %v426
    %564 = vmatprep.subr.bf16.mxu0 0
    %565 = vmatpush1.bf16.msra.mxu0 %v427
    %566 = vmatprep.subr.bf16.mxu0 0
    %567 = vmatpush1.bf16.msra.mxu0 %v428
    %568 = vmatprep.subr.bf16.mxu0 0
    %569 = vmatpush1.bf16.msra.mxu0 %v429
    %570 = vmatprep.subr.bf16.mxu0 0
    %571 = vmatpush1.bf16.msra.mxu0 %v430
    %572 = vmatprep.subr.bf16.mxu0 0
    %573 = vmatpush1.bf16.msra.mxu0 %v431
    %574 = vmatprep.mubr.bf16.mxu0 %v95
    %575 = vmatmul.mubr.bf16.gmra.mrb[0].mxu0 %v94
    %v576 = vpop.f32.mrb[0].mxu0
    %v577 = vadd.f32 %v537, %v576
    %v578 = vpop.f32.mrb[0].mxu0
    %v579 = vpop.f32.mrb[0].mxu0
    %v580 = vpop.f32.mrb[0].mxu0
    %581 = vdwg.mxu0
    %582 = vmatprep.subr.bf16.mxu0 0
    %583 = vmatpush1.bf16.msra.mxu0 %v432
    %584 = vmatprep.subr.bf16.mxu0 0
    %585 = vmatpush1.bf16.msra.mxu0 %v433
    %586 = vmatprep.subr.bf16.mxu0 0
    %587 = vmatpush1.bf16.msra.mxu0 %v434
    %588 = vmatprep.subr.bf16.mxu0 0
    %589 = vmatpush1.bf16.msra.mxu0 %v435
    %590 = vmatprep.subr.bf16.mxu0 0
    %591 = vmatpush1.bf16.msra.mxu0 %v436
    %592 = vmatprep.subr.bf16.mxu0 0
    %593 = vmatpush1.bf16.msra.mxu0 %v437
    %594 = vmatprep.subr.bf16.mxu0 0
    %595 = vmatpush1.bf16.msra.mxu0 %v438
    %596 = vmatprep.subr.bf16.mxu0 0
    %597 = vmatpush1.bf16.msra.mxu0 %v439
    %598 = vmatprep.subr.bf16.mxu0 0
    %599 = vmatpush1.bf16.msra.mxu0 %v440
    %600 = vmatprep.subr.bf16.mxu0 0
    %601 = vmatpush1.bf16.msra.mxu0 %v441
    %602 = vmatprep.subr.bf16.mxu0 0
    %603 = vmatpush1.bf16.msra.mxu0 %v442
    %604 = vmatprep.subr.bf16.mxu0 0
    %605 = vmatpush1.bf16.msra.mxu0 %v443
    %606 = vmatprep.subr.bf16.mxu0 0
    %607 = vmatpush1.bf16.msra.mxu0 %v444
    %608 = vmatprep.subr.bf16.mxu0 0
    %609 = vmatpush1.bf16.msra.mxu0 %v445
    %610 = vmatprep.subr.bf16.mxu0 0
    %611 = vmatpush1.bf16.msra.mxu0 %v446
    %612 = vmatprep.subr.bf16.mxu0 0
    %613 = vmatpush1.bf16.msra.mxu0 %v447
    %614 = vmatprep.mubr.bf16.mxu0 %v97
    %615 = vmatmul.mubr.bf16.gmra.mrb[0].mxu0 %v96
    %v616 = vpop.f32.mrb[0].mxu0
    %v617 = vadd.f32 %v577, %v616
    %v618 = vpop.f32.mrb[0].mxu0
    %v619 = vpop.f32.mrb[0].mxu0
    %v620 = vpop.f32.mrb[0].mxu0
    %621 = vdwg.mxu0
    %622 = vmatprep.subr.bf16.mxu0 0
    %623 = vmatpush1.bf16.msra.mxu0 %v448
    %624 = vmatprep.subr.bf16.mxu0 0
    %625 = vmatpush1.bf16.msra.mxu0 0
    %626 = vmatprep.subr.bf16.mxu0 0
    %627 = vmatpush1.bf16.msra.mxu0 0
    %628 = vmatprep.subr.bf16.mxu0 0
    %629 = vmatpush1.bf16.msra.mxu0 0
    %630 = vmatprep.subr.bf16.mxu0 0
    %631 = vmatpush1.bf16.msra.mxu0 0
    %632 = vmatprep.subr.bf16.mxu0 0
    %633 = vmatpush1.bf16.msra.mxu0 0
    %634 = vmatprep.subr.bf16.mxu0 0
    %635 = vmatpush1.bf16.msra.mxu0 0
    %636 = vmatprep.subr.bf16.mxu0 0
    %637 = vmatpush1.bf16.msra.mxu0 0
    %638 = vmatprep.subr.bf16.mxu0 0
    %639 = vmatpush1.bf16.msra.mxu0 0
    %640 = vmatprep.subr.bf16.mxu0 0
    %641 = vmatpush1.bf16.msra.mxu0 0
    %642 = vmatprep.subr.bf16.mxu0 0
    %643 = vmatpush1.bf16.msra.mxu0 0
    %644 = vmatprep.subr.bf16.mxu0 0
    %645 = vmatpush1.bf16.msra.mxu0 0
    %646 = vmatprep.subr.bf16.mxu0 0
    %647 = vmatpush1.bf16.msra.mxu0 0
    %648 = vmatprep.subr.bf16.mxu0 0
    %649 = vmatpush1.bf16.msra.mxu0 0
    %650 = vmatprep.subr.bf16.mxu0 0
    %651 = vmatpush1.bf16.msra.mxu0 0
    %652 = vmatprep.subr.bf16.mxu0 0
    %653 = vmatpush1.bf16.msra.mxu0 0
    %654 = vmatprep.mubr.bf16.mxu0 0
    %655 = vmatmul.mubr.bf16.gmra.mrb[0].mxu0 %v500
    %v656 = vpop.f32.mrb[0].mxu0
    %v657 = vadd.f32 %v617, %v656
    %v658 = vpop.f32.mrb[0].mxu0
    %v659 = vpop.f32.mrb[0].mxu0
    %v660 = vpop.f32.mrb[0].mxu0
    %661 = vdwg.mxu0
    %vm662 = vcmp.gt.f32.partialorder %v657, 0.0
    %v663 = vmul.f32 %v657, 0.2
    %v664 = vsel %vm662, %v657, %v663
    %v665 = vld [vmem:[%s3] sm:$0x1]
    %v667 = vlaneseq
    %v668 = vshrl.u32 %v667, 7
    %v669 = vsub.s32 0, %v668
    %v670 = vrot.slane %v665, %v669
    %v672 = vmul.f32 %v664, %v670
    %vm673 = vcmask 1041408
    %v674 = vsel %vm673, %v672, 0.0
    %675 = vadd.xlane.f32.xlu0 %v674
    %v676 = vpop.xlane.xlu0 %675
    %s677 = sld [smem:[#allocation2]]
    %v678 = vstv %s677
    %v679 = vadd.f32 %v676, %v678
    %v680 = vand.u32 2147483647, %v679
    %v681 = vsub.f32 0.0, %v680
    %v682 = vmul.f32 %v681, 1.442695
    %v683 = vpow.pop %v682
    %vm684 = vcmp.ge.f32.partialorder %v679, 0.0
    %v685 = vadd.f32 %v683, 1.0
    %v686 = vrcp.pop %v685
    %v687 = vmul.f32 1.0, %v686
    %v688 = vmul.f32 %v683, %v686
    %v689 = vsel %vm684, %v687, %v688
    %vm690 = vcmask 1024
    %691 = vst.msk [vmem:[%s5] sm:$0x3] %vm690, %v689
    // Predicated region
    $region30: #{tpu_custom_call.1} parent=1 // pred_check
      _
    $region31: #{tpu_custom_call.1} parent=1 // pred_check_branch
      %693 = sbr.rel (0) target = $region33
    $region32: #{tpu_custom_call.1} parent=1 // pred_region
      _
    $region33: #{tpu_custom_call.1} parent=1 // pred_fallthru
      _
    // Predicated region
    $region34: #{tpu_custom_call.1} parent=1 // pred_check
      _
    $region35: #{tpu_custom_call.1} parent=1 // pred_check_branch
      %695 = sbr.rel (0) target = $region37
    $region36: #{tpu_custom_call.1} parent=1 // pred_region
      _
    $region37: #{tpu_custom_call.1} parent=1 // pred_fallthru
      _
    %696 = vsyncpa [#allocation4], 1
    %697 = vsyncpa [#allocation6], 1

</llo_original>
